<compile_context>
chip_gen: v7x
topology: tpu7x:2x2x1
jax: 0.10.0
libtpu: 0.0.40
codegen_flags: <defaults>
</compile_context>

<pallas_src>
import numpy as np
import jax
import jax.numpy as jnp
from jax.experimental import pallas as pl
from jax.experimental.pallas import tpu as pltpu


def _round_up(x: int, m: int) -> int:
    return ((x + m - 1) // m) * m


# ---------------------------------------------------------------------------
# Gate network kernel: mag = mean_C |Xf|, logits = mag @ Wg^T + bg, softmax.
# ---------------------------------------------------------------------------
def _gate_kernel(xr_ref, xi_ref, wg_ref, bg_ref, gate_ref):
    xr = xr_ref[...]                                              # (B, C, Fp)
    xi = xi_ref[...]
    mag = jnp.mean(jnp.sqrt(xr * xr + xi * xi), axis=1)           # (B, Fp)
    logits = jnp.dot(mag, wg_ref[...],
                     preferred_element_type=jnp.float32) + bg_ref[...]   # (B, N)
    logits = logits - jnp.max(logits, axis=-1, keepdims=True)
    exps = jnp.exp(logits)
    gate_ref[...] = exps / jnp.sum(exps, axis=-1, keepdims=True)


# ---------------------------------------------------------------------------
# Expert kernel.  Grid = (row_tiles, num_experts); the expert axis reduces into
# the resident output block.  Real & imag rows stacked along M -> each weight
# matrix pushed through the MXU once per layer.
# ---------------------------------------------------------------------------
def _freqmoe_kernel(xr_ref, xi_ref, gate_ref, mask_ref,
                    w1r_ref, w1i_ref, b1r_ref, b1i_ref,
                    w2r_ref, w2i_ref, b2r_ref, b2i_ref,
                    yr_ref, yi_ref):
    e = pl.program_id(1)

    @pl.when(e == 0)
    def _():
        yr_ref[...] = jnp.zeros_like(yr_ref)
        yi_ref[...] = jnp.zeros_like(yi_ref)

    tm = xr_ref.shape[0]
    m = mask_ref[0]                                   # (1, Fp) band mask
    xr = xr_ref[...] * m                              # (TM, Fp)
    xi = xi_ref[...] * m

    # ---- ComplexLinear #1 (weights are (in, out)) ----
    x2 = jnp.concatenate([xr, xi], axis=0)            # (2*TM, Fp)
    p = jnp.dot(x2, w1r_ref[0], preferred_element_type=jnp.float32)  # [xr@Wr ; xi@Wr]
    q = jnp.dot(x2, w1i_ref[0], preferred_element_type=jnp.float32)  # [xr@Wi ; xi@Wi]
    h_re = p[:tm] - q[tm:] + b1r_ref[0]
    h_im = p[tm:] + q[:tm] + b1i_ref[0]

    # complex ReLU (relu on real and imag independently)
    h_re = jnp.maximum(h_re, 0.0)
    h_im = jnp.maximum(h_im, 0.0)

    # ---- ComplexLinear #2 ----
    h2 = jnp.concatenate([h_re, h_im], axis=0)        # (2*TM, Fp)
    s = jnp.dot(h2, w2r_ref[0], preferred_element_type=jnp.float32)
    t = jnp.dot(h2, w2i_ref[0], preferred_element_type=jnp.float32)
    y_re = s[:tm] - t[tm:] + b2r_ref[0]
    y_im = s[tm:] + t[:tm] + b2i_ref[0]

    # ---- gated accumulation into the resident output block ----
    g = gate_ref[0]                                   # (TM, 1) per-row gate weight
    yr_ref[...] += y_re * g
    yi_ref[...] += y_im * g


# ---------------------------------------------------------------------------
# Parameter / mask helpers (match PyTorch module init).
# ---------------------------------------------------------------------------
def compute_masks(num_experts: int, freq_bins: int) -> np.ndarray:
    """FrequencyBands.forward with bound_params = zeros (its init value)."""
    raw = 1.0 / (1.0 + np.exp(-np.zeros(num_experts - 1)))        # sigmoid(0) = 0.5
    all_bounds = np.concatenate(([0.0], raw, [1.0]))
    sorted_bounds = np.sort(all_bounds)
    indices = (sorted_bounds * (freq_bins - 1)).astype(np.int64)
    masks = np.zeros((num_experts, freq_bins), dtype=np.float32)
    for i in range(num_experts):
        s = int(indices[i])
        e = int(indices[i + 1]) if i < num_experts - 1 else freq_bins
        if e > s:
            masks[i, s:e] = 1.0
    return masks


def init_params(key, num_experts: int, freq_bins: int):
    ks = jax.random.split(key, 6)
    p = {
        'w1r': jax.random.normal(ks[0], (num_experts, freq_bins, freq_bins), jnp.float32) * 0.1,
        'w1i': jax.random.normal(ks[1], (num_experts, freq_bins, freq_bins), jnp.float32) * 0.1,
        'b1r': jnp.zeros((num_experts, freq_bins), jnp.float32),
        'b1i': jnp.zeros((num_experts, freq_bins), jnp.float32),
        'w2r': jax.random.normal(ks[2], (num_experts, freq_bins, freq_bins), jnp.float32) * 0.1,
        'w2i': jax.random.normal(ks[3], (num_experts, freq_bins, freq_bins), jnp.float32) * 0.1,
        'b2r': jnp.zeros((num_experts, freq_bins), jnp.float32),
        'b2i': jnp.zeros((num_experts, freq_bins), jnp.float32),
    }
    bound = 1.0 / np.sqrt(freq_bins)                              # nn.Linear default init range
    p['wg'] = jax.random.uniform(ks[4], (num_experts, freq_bins), jnp.float32, -bound, bound)
    p['bg'] = jax.random.uniform(ks[5], (1, num_experts), jnp.float32, -bound, bound)
    return p


# ---------------------------------------------------------------------------
# Forward pass wrapper.
# ---------------------------------------------------------------------------
def freq_moe_block(x_time, params, masks):
    B, C, L = x_time.shape
    F = L // 2 + 1
    N = masks.shape[0]
    Fp = _round_up(F, 128)                 # lane-dense frequency axis
    M = B * C
    TM = 256 if M >= 256 else _round_up(M, 8)
    M_pad = _round_up(M, TM)
    R = M_pad // TM
    pad_f = Fp - F
    pad_m = M_pad - M

    # TODO(synk): rfft/irfft have no Pallas TPU primitive; they stay in plain JAX.
    Xf = jnp.fft.rfft(x_time, axis=-1)
    xr3 = jnp.pad(jnp.real(Xf).astype(jnp.float32), ((0, 0), (0, 0), (0, pad_f)))
    xi3 = jnp.pad(jnp.imag(Xf).astype(jnp.float32), ((0, 0), (0, 0), (0, pad_f)))

    # ---------------- gate network (tiny, its own pallas call) ----------------
    wg_t = jnp.pad(params['wg'].T, ((0, pad_f), (0, 0)))          # (Fp, N), zero rows in pad
    vmem = pl.BlockSpec(memory_space=pltpu.MemorySpace.VMEM)
    gate = pl.pallas_call(
        _gate_kernel,
        out_shape=jax.ShapeDtypeStruct((B, N), jnp.float32),
        in_specs=[vmem] * 4,
        out_specs=vmem,
    )(xr3, xi3, wg_t, params['bg'])                               # (B, N)

    # ---------------- flatten rows, pad, build per-expert gate column ---------
    xr = jnp.pad(xr3.reshape(M, Fp), ((0, pad_m), (0, 0)))        # (M_pad, Fp)
    xi = jnp.pad(xi3.reshape(M, Fp), ((0, pad_m), (0, 0)))

    gate_rows = jnp.pad(jnp.repeat(gate, C, axis=0), ((0, pad_m), (0, 0)))   # (M_pad, N)
    gate_e = jnp.transpose(gate_rows)[:, :, None]                            # (N, M_pad, 1)

    masks_p = jnp.pad(masks, ((0, 0), (0, pad_f)))[:, None, :]               # (N, 1, Fp)

    def prep_w(w):   # (N, out, in) -> (N, in_pad, out_pad): kernel contracts X @ W
        wt = jnp.transpose(w, (0, 2, 1))
        return jnp.pad(wt, ((0, 0), (0, pad_f), (0, pad_f)))

    def prep_b(b):   # (N, F) -> (N, 1, Fp)
        return jnp.pad(b, ((0, 0), (0, pad_f)))[:, None, :]

    w1r, w1i = prep_w(params['w1r']), prep_w(params['w1i'])
    w2r, w2i = prep_w(params['w2r']), prep_w(params['w2i'])
    b1r, b1i = prep_b(params['b1r']), prep_b(params['b1i'])
    b2r, b2i = prep_b(params['b2r']), prep_b(params['b2i'])

    row_spec = pl.BlockSpec((TM, Fp), lambda r, e: (r, 0))
    expert_w_spec = pl.BlockSpec((1, Fp, Fp), lambda r, e: (e, 0, 0))
    expert_v_spec = pl.BlockSpec((1, 1, Fp), lambda r, e: (e, 0, 0))
    gate_spec = pl.BlockSpec((1, TM, 1), lambda r, e: (e, r, 0))

    # Advisory cost estimate for XLA scheduling around the rfft/irfft.
    flops = 16 * N * M_pad * Fp * Fp                       # 4 dots of (2*TM,Fp)x(Fp,Fp) per cell
    bytes_accessed = (R * N * 4 * Fp * Fp * 4              # expert weights (per cell)
                      + N * 2 * M_pad * Fp * 4             # activations reread per expert
                      + 2 * M_pad * Fp * 4)                # outputs
    cost = pl.CostEstimate(flops=flops, transcendentals=0, bytes_accessed=bytes_accessed)

    # Explicit VMEM budget: one expert's weights (double-buffered) + row tiles.
    f32b = 4
    est = 2 * (4 * Fp * Fp * f32b + 6 * Fp * f32b + TM * f32b + 4 * TM * Fp * f32b) \
          + 8 * TM * Fp * f32b
    vmem_limit = int(min(max(2 * est, 16 << 20), 32 << 20))

    yr, yi = pl.pallas_call(
        _freqmoe_kernel,
        out_shape=(jax.ShapeDtypeStruct((M_pad, Fp), jnp.float32),
                   jax.ShapeDtypeStruct((M_pad, Fp), jnp.float32)),
        grid_spec=pltpu.PrefetchScalarGridSpec(
            num_scalar_prefetch=0,
            grid=(R, N),
            in_specs=[row_spec, row_spec, gate_spec, expert_v_spec,
                      expert_w_spec, expert_w_spec, expert_v_spec, expert_v_spec,
                      expert_w_spec, expert_w_spec, expert_v_spec, expert_v_spec],
            out_specs=(row_spec, row_spec),
        ),
        compiler_params=pltpu.CompilerParams(
            dimension_semantics=("parallel", "arbitrary"),
            vmem_limit_bytes=vmem_limit),
        cost_estimate=cost,
    )(xr, xi, gate_e, masks_p, w1r, w1i, b1r, b1i, w2r, w2i, b2r, b2i)

    yr = yr[:M, :F].reshape(B, C, F)
    yi = yi[:M, :F].reshape(B, C, F)
    return jnp.fft.irfft(yr + 1j * yi, n=L, axis=-1)


# ---------------------------------------------------------------------------
# Pure-JAX reference mirroring the PyTorch forward (complex arithmetic).
# ---------------------------------------------------------------------------
def reference(x_time, params, masks):
    B, C, L = x_time.shape
    Xf = jnp.fft.rfft(x_time, axis=-1)
    mag = jnp.mean(jnp.abs(Xf), axis=1)
    logits = mag @ params['wg'].T + params['bg'][0]
    gate = jax.nn.softmax(logits, axis=-1)
    comb = jnp.zeros_like(Xf)
    for i in range(masks.shape[0]):
        Xi = Xf * masks[i][None, None, :]
        W1 = params['w1r'][i] + 1j * params['w1i'][i]
        b1 = params['b1r'][i] + 1j * params['b1i'][i]
        h = jnp.einsum('bcf,gf->bcg', Xi, W1) + b1
        h = jax.nn.relu(h.real) + 1j * jax.nn.relu(h.imag)
        W2 = params['w2r'][i] + 1j * params['w2i'][i]
        b2 = params['b2r'][i] + 1j * params['b2i'][i]
        y = jnp.einsum('bcf,gf->bcg', h, W2) + b2
        comb = comb + y * gate[:, i][:, None, None]
    return jnp.fft.irfft(comb, n=L, axis=-1)


if __name__ == "__main__":
    B, C, L, N = 2, 4, 16, 2          # lookback L=16 -> F = 9 frequency bins
    freq_bins = L // 2 + 1

    key = jax.random.PRNGKey(0)
    kx, kp = jax.random.split(key)
    x_time = jax.random.normal(kx, (B, C, L), jnp.float32)
    params = init_params(kp, N, freq_bins)
    masks = jnp.asarray(compute_masks(N, freq_bins))

    out = freq_moe_block(x_time, params, masks)
    out = jax.block_until_ready(out)

    ref = reference(x_time, params, masks)
    assert out.shape == (B, C, L)
    np.testing.assert_allclose(np.asarray(out), np.asarray(ref), rtol=1e-4, atol=1e-4)

    print("KERNEL_OK")
</pallas_src>

<mosaic_0001>
module attributes {stable_mosaic.version = 11 : i64} {
  func.func @_gate_kernel(%arg0: memref<2x4x128xf32, #tpu.memory_space<vmem>>, %arg1: memref<2x4x128xf32, #tpu.memory_space<vmem>>, %arg2: memref<128x2xf32, #tpu.memory_space<vmem>>, %arg3: memref<1x2xf32, #tpu.memory_space<vmem>>, %arg4: memref<2x2xf32, #tpu.memory_space<vmem>>) attributes {dimension_semantics = [], scalar_prefetch = 0 : i64, scratch_operands = 0 : i64, tpu.core_type = #tpu.core_type<tc>} {
    %c0 = arith.constant 0 : index
    %c0_0 = arith.constant 0 : index
    %c0_1 = arith.constant 0 : index
    %0 = vector.load %arg0[%c0, %c0_0, %c0_1] : memref<2x4x128xf32, #tpu.memory_space<vmem>>, vector<2x4x128xf32>
    %c0_2 = arith.constant 0 : index
    %c0_3 = arith.constant 0 : index
    %c0_4 = arith.constant 0 : index
    %1 = vector.load %arg1[%c0_2, %c0_3, %c0_4] : memref<2x4x128xf32, #tpu.memory_space<vmem>>, vector<2x4x128xf32>
    %2 = arith.mulf %0, %0 : vector<2x4x128xf32>
    %3 = arith.mulf %1, %1 : vector<2x4x128xf32>
    %4 = arith.addf %2, %3 : vector<2x4x128xf32>
    %5 = math.sqrt %4 : vector<2x4x128xf32>
    %cst = arith.constant dense<0.000000e+00> : vector<2x128xf32>
    %6 = vector.multi_reduction <add>, %5, %cst [1] : vector<2x4x128xf32> to vector<2x128xf32>
    %cst_5 = arith.constant 4.000000e+00 : f32
    %7 = vector.broadcast %cst_5 : f32 to vector<2x128xf32>
    %8 = arith.divf %6, %7 : vector<2x128xf32>
    %c0_6 = arith.constant 0 : index
    %c0_7 = arith.constant 0 : index
    %9 = vector.load %arg2[%c0_6, %c0_7] : memref<128x2xf32, #tpu.memory_space<vmem>>, vector<128x2xf32>
    %cst_8 = arith.constant dense<0.000000e+00> : vector<2x2xf32>
    %10 = tpu.matmul %8, %9, %cst_8 {dimension_numbers = #tpu.dot_dimension_numbers<[1], [0], [0], [1], [0, 0, 1, 1], [], []>} : vector<2x128xf32>, vector<128x2xf32>, vector<2x2xf32> -> vector<2x2xf32>
    %c0_9 = arith.constant 0 : index
    %c0_10 = arith.constant 0 : index
    %11 = vector.load %arg3[%c0_9, %c0_10] : memref<1x2xf32, #tpu.memory_space<vmem>>, vector<1x2xf32>
    %12 = vector.broadcast %11 : vector<1x2xf32> to vector<2x2xf32>
    %13 = arith.addf %10, %12 : vector<2x2xf32>
    %cst_11 = arith.constant dense<0xFF800000> : vector<2xf32>
    %14 = vector.multi_reduction <maximumf>, %13, %cst_11 [1] : vector<2x2xf32> to vector<2xf32>
    %15 = vector.shape_cast %14 : vector<2xf32> to vector<2x1xf32>
    %16 = vector.broadcast %15 : vector<2x1xf32> to vector<2x2xf32>
    %17 = arith.subf %13, %16 : vector<2x2xf32>
    %18 = math.exp %17 : vector<2x2xf32>
    %cst_12 = arith.constant dense<0.000000e+00> : vector<2xf32>
    %19 = vector.multi_reduction <add>, %18, %cst_12 [1] : vector<2x2xf32> to vector<2xf32>
    %20 = vector.shape_cast %19 : vector<2xf32> to vector<2x1xf32>
    %21 = vector.broadcast %20 : vector<2x1xf32> to vector<2x2xf32>
    %22 = arith.divf %18, %21 : vector<2x2xf32>
    %c0_13 = arith.constant 0 : index
    %c0_14 = arith.constant 0 : index
    %23 = vector.load %arg4[%c0_13, %c0_14] : memref<2x2xf32, #tpu.memory_space<vmem>>, vector<2x2xf32>
    tpu.vector_store %arg4[%c0_13, %c0_14], %22 {strides = array<i32>} : memref<2x2xf32, #tpu.memory_space<vmem>>, vector<2x2xf32>,
    return
  }
}

</mosaic_0001>

<llo_original>
// kernel: tpu_custom_call.1
$region0: #{tpu_custom_call.1}
  #allocation0 [shape = 'u32[]', space=smem, size = 0x4, offset = 0x4, fixed_abs, tag = 'smem constant byte address 0x4 - core index']
  #allocation1 [shape = 'u32[144,128]{1,0:T(1,128)}', space=vmem, size = 0x12000, scoped, tag = 'internal scratch']
  %s0 = inlined_call_operand.vmem [shape: f32[2,4,128], index: 0, kind: input, shape index: {}]
  %s1 = inlined_call_operand.vmem [shape: f32[2,4,128], index: 1, kind: input, shape index: {}]
  %s2 = inlined_call_operand.vmem [shape: f32[128,2], index: 2, kind: input, shape index: {}]
  %s3 = inlined_call_operand.vmem [shape: f32[1,2], index: 3, kind: input, shape index: {}]
  %s4 = inlined_call_operand.hbm [shape: f32[2,2], index: 4, kind: output, shape index: {}]
  %s5 = sld [smem:[#allocation0]]
  $region26: #{tpu_custom_call.1} parent=0
    _
  %s7 = ssub.s32 1, %s5
  %s8 = scalar_select 0, %s7, %s5
  $region1: #{tpu_custom_call.1} parent=0
    #allocation2 [shape = 'u8[1024]{0}', space=vmem, size = 0x400, scoped, tag = 'output window, operand 0, single buffered']
    #allocation3 [shape = 's32[1]{0}', space=sflag, size = 0x4, scoped, tag = 'scoped memory for tpu_custom_call.1']
    %9 = vsyncpa [#allocation3], 0
    // Predicated region
    $region2: #{tpu_custom_call.1} parent=1 // pred_check
      _
    $region3: #{tpu_custom_call.1} parent=1 // pred_check_branch
      %11 = sbr.rel (0) target = $region5
    $region4: #{tpu_custom_call.1} parent=1 // pred_region
      _
    $region5: #{tpu_custom_call.1} parent=1 // pred_fallthru
      _
    // Predicated region
    $region6: #{tpu_custom_call.1} parent=1 // pred_check
      _
    $region7: #{tpu_custom_call.1} parent=1 // pred_check_branch
      %13 = sbr.rel (0) target = $region9
    $region8: #{tpu_custom_call.1} parent=1 // pred_region
      _
    $region9: #{tpu_custom_call.1} parent=1 // pred_fallthru
      _
    // Predicated region
    $region10: #{tpu_custom_call.1} parent=1 // pred_check
      _
    $region11: #{tpu_custom_call.1} parent=1 // pred_check_branch
      %15 = sbr.rel (0) target = $region13
    $region12: #{tpu_custom_call.1} parent=1 // pred_region
      _
    $region13: #{tpu_custom_call.1} parent=1 // pred_fallthru
      _
    // Predicated region
    $region14: #{tpu_custom_call.1} parent=1 // pred_check
      _
    $region15: #{tpu_custom_call.1} parent=1 // pred_check_branch
      %17 = sbr.rel (0) target = $region17
    $region16: #{tpu_custom_call.1} parent=1 // pred_region
      _
    $region17: #{tpu_custom_call.1} parent=1 // pred_fallthru
      _
    %v18 = vld [vmem:[%s0] sm:$0xf]
    %v19 = vld [vmem:[%s0 + $0x4] sm:$0xf]
    %v20 = vld [vmem:[%s1] sm:$0xf]
    %v21 = vld [vmem:[%s1 + $0x4] sm:$0xf]
    %v22 = vmul.f32 %v18, %v18
    %v23 = vmul.f32 %v19, %v19
    %v24 = vmul.f32 %v20, %v20
    %v25 = vmul.f32 %v21, %v21
    %v26 = vadd.f32 %v22, %v24
    %v27 = vadd.f32 %v23, %v25
    %v28 = vrsqrt.pop %v26
    %v29 = vmul.f32 %v26, %v28
    %vm30 = vcmp.eq.f32.partialorder %v26, inf
    %v31 = vsel %vm30, %v26, %v29
    %vm32 = vcmp.eq.f32.partialorder %v26, 0.0
    %v33 = vand.u32 %v26, 2147483648
    %v34 = vsel %vm32, %v33, %v31
    %v35 = vrsqrt.pop %v27
    %v36 = vmul.f32 %v27, %v35
    %vm37 = vcmp.eq.f32.partialorder %v27, inf
    %v38 = vsel %vm37, %v27, %v36
    %vm39 = vcmp.eq.f32.partialorder %v27, 0.0
    %v40 = vand.u32 %v27, 2147483648
    %v41 = vsel %vm39, %v40, %v38
    %vm42 = vcmask 1043456
    %v43 = vsel %vm42, %v34, 0.0
    %v44 = vrot.slane %v43, 4
    %v45 = vadd.f32 %v43, %v44
    %v46 = vrot.slane %v45, 2
    %v47 = vadd.f32 %v45, %v46
    %v48 = vrot.slane %v47, 1
    %v49 = vadd.f32 %v47, %v48
    %v50 = vsel %vm42, %v41, 0.0
    %v51 = vrot.slane %v50, 4
    %v52 = vadd.f32 %v50, %v51
    %v53 = vrot.slane %v52, 2
    %v54 = vadd.f32 %v52, %v53
    %v55 = vrot.slane %v54, 1
    %v56 = vadd.f32 %v54, %v55
    %v57 = vrcp.pop 4.0
    %v58 = vmul.f32 %v49, %v57
    %v59 = vmul.f32 %v56, %v57
    %v60 = vld [vmem:[%s2] sm:$0xff]
    %v61 = vld [vmem:[%s2 + $0x8] sm:$0xff]
    %v62 = vld [vmem:[%s2 + $0x10] sm:$0xff]
    %v63 = vld [vmem:[%s2 + $0x18] sm:$0xff]
    %v64 = vld [vmem:[%s2 + $0x20] sm:$0xff]
    %v65 = vld [vmem:[%s2 + $0x28] sm:$0xff]
    %v66 = vld [vmem:[%s2 + $0x30] sm:$0xff]
    %v67 = vld [vmem:[%s2 + $0x38] sm:$0xff]
    %v68 = vld [vmem:[%s2 + $0x40] sm:$0xff]
    %v69 = vld [vmem:[%s2 + $0x48] sm:$0xff]
    %v70 = vld [vmem:[%s2 + $0x50] sm:$0xff]
    %v71 = vld [vmem:[%s2 + $0x58] sm:$0xff]
    %v72 = vld [vmem:[%s2 + $0x60] sm:$0xff]
    %v73 = vld [vmem:[%s2 + $0x68] sm:$0xff]
    %v74 = vld [vmem:[%s2 + $0x70] sm:$0xff]
    %v75 = vld [vmem:[%s2 + $0x78] sm:$0xff]
    %v76 = vld [vmem:[%s3] sm:$0x1]
    %v78 = vlaneseq
    %v79 = vshrl.u32 %v78, 7
    %v80 = vsub.s32 0, %v79
    %v81 = vrot.slane %v76, %v80
    %vm85 = vcmask 1041409
    %v86 = vsel %vm85, %v59, %v58
    %88 = vmatprep.subr.mxu0 0.0
    %89 = vmatpush1.msra.mxu0 %v60
    %90 = vmatprep.subr.mxu0 0.0
    %91 = vmatpush1.msra.mxu0 %v61
    %92 = vmatprep.subr.mxu0 0.0
    %93 = vmatpush1.msra.mxu0 %v62
    %94 = vmatprep.subr.mxu0 0.0
    %95 = vmatpush1.msra.mxu0 %v63
    %96 = vmatprep.subr.mxu0 0.0
    %97 = vmatpush1.msra.mxu0 %v64
    %98 = vmatprep.subr.mxu0 0.0
    %99 = vmatpush1.msra.mxu0 %v65
    %100 = vmatprep.subr.mxu0 0.0
    %101 = vmatpush1.msra.mxu0 %v66
    %102 = vmatprep.subr.mxu0 0.0
    %103 = vmatpush1.msra.mxu0 %v67
    %104 = vmatprep.subr.mxu0 0.0
    %105 = vmatpush1.msra.mxu0 %v68
    %106 = vmatprep.subr.mxu0 0.0
    %107 = vmatpush1.msra.mxu0 %v69
    %108 = vmatprep.subr.mxu0 0.0
    %109 = vmatpush1.msra.mxu0 %v70
    %110 = vmatprep.subr.mxu0 0.0
    %111 = vmatpush1.msra.mxu0 %v71
    %112 = vmatprep.subr.mxu0 0.0
    %113 = vmatpush1.msra.mxu0 %v72
    %114 = vmatprep.subr.mxu0 0.0
    %115 = vmatpush1.msra.mxu0 %v73
    %116 = vmatprep.subr.mxu0 0.0
    %117 = vmatpush1.msra.mxu0 %v74
    %118 = vmatprep.subr.mxu0 0.0
    %119 = vmatpush1.msra.mxu0 %v75
    %120 = vmatprep.subr.mxu0 0.0
    %121 = vmatpush1.msra.mxu0 0.0
    %122 = vmatprep.subr.mxu0 0.0
    %123 = vmatpush1.msra.mxu0 0.0
    %124 = vmatprep.subr.mxu0 0.0
    %125 = vmatpush1.msra.mxu0 0.0
    %126 = vmatprep.subr.mxu0 0.0
    %127 = vmatpush1.msra.mxu0 0.0
    %128 = vmatprep.subr.mxu0 0.0
    %129 = vmatpush1.msra.mxu0 0.0
    %130 = vmatprep.subr.mxu0 0.0
    %131 = vmatpush1.msra.mxu0 0.0
    %132 = vmatprep.subr.mxu0 0.0
    %133 = vmatpush1.msra.mxu0 0.0
    %134 = vmatprep.subr.mxu0 0.0
    %135 = vmatpush1.msra.mxu0 0.0
    %136 = vmatprep.subr.mxu0 0.0
    %137 = vmatpush1.msra.mxu0 0.0
    %138 = vmatprep.subr.mxu0 0.0
    %139 = vmatpush1.msra.mxu0 0.0
    %140 = vmatprep.subr.mxu0 0.0
    %141 = vmatpush1.msra.mxu0 0.0
    %142 = vmatprep.subr.mxu0 0.0
    %143 = vmatpush1.msra.mxu0 0.0
    %144 = vmatprep.subr.mxu0 0.0
    %145 = vmatpush1.msra.mxu0 0.0
    %146 = vmatprep.subr.mxu0 0.0
    %147 = vmatpush1.msra.mxu0 0.0
    %148 = vmatprep.subr.mxu0 0.0
    %149 = vmatpush1.msra.mxu0 0.0
    %150 = vmatprep.subr.mxu0 0.0
    %151 = vmatpush1.msra.mxu0 0.0
    %152 = vmatprep.mubr.f32.mxu0 0.0
    %153 = vmatmul.mubr.f32.gmra.mrb[0].mxu0 %v86
    %v154 = vpop.f32.mrb[0].mxu0
    %v155 = vadd.f32 %v81, %v154
    %v156 = vpop.f32.mrb[0].mxu0
    %157 = vdwg.mxu0
    %vm158 = vcmask 9216
    %v159 = vsel %vm158, %v155, -inf
    %160 = vmax.xlane.f32.xlu0 %v159
    %v161 = vpop.xlane.xlu0 %160
    %v162 = vsub.f32 %v155, %v161
    %v163 = vmul.f32 %v162, 1.442695
    %v164 = vpow.pop %v163
    %v165 = vsel %vm158, %v164, 0.0
    %166 = vadd.xlane.f32.xlu0 %v165
    %v167 = vpop.xlane.xlu0 %166
    %v168 = vrcp.pop %v167
    %v169 = vmul.f32 %v164, %v168
    %170 = vst.msk [vmem:[#allocation2] sm:$0x3] %vm158, %v169
    // Predicated region
    $region18: #{tpu_custom_call.1} parent=1 // pred_check
      _
    $region19: #{tpu_custom_call.1} parent=1 // pred_check_branch
      %172 = sbr.rel (0) target = $region21
    $region20: #{tpu_custom_call.1} parent=1 // pred_region
      %s174 = ssub.s32 32, 32
      %175 = vsyncadd [#allocation3], %s174
      %s177 = sshll.u32 [#allocation2], 4
      %s178 = int_to_ptr.vmem [resolvable:$true] %s177
      %180 = dma.vmem_to_hbm [thread:$0]  %s178, 32, %s4, [#allocation3]
    $region21: #{tpu_custom_call.1} parent=1 // pred_fallthru
      _
    // Predicated region
    $region22: #{tpu_custom_call.1} parent=1 // pred_check
      _
    $region23: #{tpu_custom_call.1} parent=1 // pred_check_branch
      %182 = sbr.rel (0) target = $region25
    $region24: #{tpu_custom_call.1} parent=1 // pred_region
      %183 = dma.done [#allocation3], 32
    $region25: #{tpu_custom_call.1} parent=1 // pred_fallthru
      _
    %184 = vsyncpa [#allocation3], 1

</llo_original>
